<compile_context>
chip_gen: v6e
topology: v6e:2x2x1
jax: 0.10.0
libtpu: 0.0.40
codegen_flags: <defaults>
</compile_context>

<pallas_src>
import numpy as np
import jax
import jax.numpy as jnp
from jax.experimental import pallas as pl
from jax.experimental.pallas import tpu as pltpu

HIDDEN = 64          # GCNConv output width
FC_HIDDEN = 32
_VMEM_LIMIT = 48 * 1024 * 1024   # explicit scoped-VMEM limit (fits v7x 64 MiB/TC)


def _round_up(x, m):
    return ((x + m - 1) // m) * m


def _choose_tiles(n):
    """(N_pad, TM, TK): (8,128)-aligned tiles, larger tiles for large graphs."""
    if n <= 1024:
        tm = tk = 128
    else:
        tm, tk = 256, 512
    n_pad = _round_up(max(n, 2 * tk), max(tm, tk))
    return n_pad, tm, tk


def _block_metadata(a_hat, n_pad, tm, tk):
    """Per-row-tile list of non-empty (TM, TK) column blocks of A_hat.

    Returns (blk_idx [ni, nk] i32, blk_cnt [ni] i32, nnz_blocks int).
    Padded slots repeat the last valid index so the pipeline re-visits the
    same block (no re-DMA) while pl.when skips the compute.
    """
    ni, nk = n_pad // tm, n_pad // tk
    try:
        a_np = np.asarray(a_hat)                     # needs concrete values
    except Exception:                                # traced -> dense schedule
        a_np = None
    if a_np is None:
        idx = np.tile(np.arange(nk, dtype=np.int32), (ni, 1))
        cnt = np.full((ni,), nk, dtype=np.int32)
        return jnp.asarray(idx), jnp.asarray(cnt), ni * nk
    a_full = np.zeros((n_pad, n_pad), dtype=np.float32)
    a_full[: a_np.shape[0], : a_np.shape[1]] = np.abs(a_np.astype(np.float32))
    nz = a_full.reshape(ni, tm, nk, tk).sum(axis=(1, 3)) > 0.0
    idx = np.zeros((ni, nk), dtype=np.int32)
    cnt = np.zeros((ni,), dtype=np.int32)
    for i in range(ni):
        cols = np.nonzero(nz[i])[0].astype(np.int32)
        cnt[i] = cols.size
        if cols.size:
            idx[i, : cols.size] = cols
            idx[i, cols.size:] = cols[-1]
    return jnp.asarray(idx), jnp.asarray(cnt), int(cnt.sum())


# --------------------------------- kernels ----------------------------------

def _linear_kernel(x_ref, w_ref, o_ref):
    # Row tile of X @ W (bf16 in, f32 accumulate, bf16 out).
    o_ref[...] = jnp.dot(x_ref[...], w_ref[...],
                         preferred_element_type=jnp.float32).astype(o_ref.dtype)


def _conv1_kernel(bidx_ref, bcnt_ref, a_ref, xw_ref, b1_ref, w2_ref,
                  o_ref, acc_ref):
    i = pl.program_id(0)
    k = pl.program_id(1)
    nk = pl.num_programs(1)

    @pl.when(k == 0)
    def _():
        acc_ref[...] = jnp.zeros_like(acc_ref)

    @pl.when(k < bcnt_ref[i])                 # skip all-zero adjacency blocks
    def _():
        acc_ref[...] += jnp.dot(a_ref[...], xw_ref[...],
                                preferred_element_type=jnp.float32)

    @pl.when(k == nk - 1)                     # bias + relu + fused (H1 @ W2)
    def _():
        h1 = jnp.maximum(acc_ref[...] + b1_ref[...], 0.0)
        o_ref[...] = jnp.dot(h1.astype(jnp.bfloat16), w2_ref[...],
                             preferred_element_type=jnp.float32
                             ).astype(o_ref.dtype)


def _conv2_pool_kernel(bidx_ref, bcnt_ref, a_ref, hw_ref, b2_ref, p_ref,
                       pooled_ref, acc_ref, pool_acc_ref):
    i = pl.program_id(0)
    k = pl.program_id(1)
    ni = pl.num_programs(0)
    nk = pl.num_programs(1)

    @pl.when((i == 0) & (k == 0))
    def _():
        pool_acc_ref[...] = jnp.zeros_like(pool_acc_ref)

    @pl.when(k == 0)
    def _():
        acc_ref[...] = jnp.zeros_like(acc_ref)

    @pl.when(k < bcnt_ref[i])                 # skip all-zero adjacency blocks
    def _():
        acc_ref[...] += jnp.dot(a_ref[...], hw_ref[...],
                                preferred_element_type=jnp.float32)

    @pl.when(k == nk - 1)                     # bias + relu + fused mean-pool
    def _():
        h2 = jnp.maximum(acc_ref[...] + b2_ref[...], 0.0)
        pool_acc_ref[...] += jnp.dot(p_ref[...], h2,
                                     preferred_element_type=jnp.float32)

    @pl.when((i == ni - 1) & (k == nk - 1))
    def _():
        pooled_ref[...] = pool_acc_ref[...]


def _head_kernel(pooled_ref, wf1_ref, bf1_ref, wf2_ref, bf2_ref, o_ref):
    z = jnp.dot(pooled_ref[...], wf1_ref[...],
                preferred_element_type=jnp.float32) + bf1_ref[...]
    z = jnp.maximum(z, 0.0)
    z = jnp.dot(z, wf2_ref[...], preferred_element_type=jnp.float32) + bf2_ref[...]
    m = jnp.max(z, axis=-1, keepdims=True)
    s = z - m
    o_ref[...] = s - jnp.log(jnp.sum(jnp.exp(s), axis=-1, keepdims=True))


# --------------------------------- wrapper ----------------------------------

def gcn_forward(params, a_hat, x, pool):
    n, f_in = x.shape
    g = pool.shape[0]
    c = params["wf2"].shape[1]
    h = HIDDEN

    n_pad, tm, tk = _choose_tiles(n)
    ni, nk = n_pad // tm, n_pad // tk
    blk_idx, blk_cnt, nnz = _block_metadata(a_hat, n_pad, tm, tk)

    # Zero-padded, bf16 MXU inputs (zero-padded rows/cols contribute nothing).
    a_p = jnp.zeros((n_pad, n_pad), jnp.bfloat16).at[:n, :n].set(
        a_hat.astype(jnp.bfloat16))
    x_p = jnp.zeros((n_pad, f_in), jnp.bfloat16).at[:n].set(x.astype(jnp.bfloat16))
    p_p = jnp.zeros((g, n_pad), jnp.float32).at[:, :n].set(pool.astype(jnp.float32))

    w1 = params["w1"].astype(jnp.bfloat16)
    w2 = params["w2"].astype(jnp.bfloat16)
    b1 = params["b1"].astype(jnp.float32)
    b2 = params["b2"].astype(jnp.float32)

    # ---- XW1 = X @ W1, row-tiled -------------------------------------------
    xw1 = pl.pallas_call(
        _linear_kernel,
        out_shape=jax.ShapeDtypeStruct((n_pad, h), jnp.bfloat16),
        grid_spec=pltpu.PrefetchScalarGridSpec(
            num_scalar_prefetch=0,
            grid=(nk,),
            in_specs=[pl.BlockSpec((tk, f_in), lambda r: (r, 0)),
                      pl.BlockSpec((f_in, h), lambda r: (0, 0))],
            out_specs=pl.BlockSpec((tk, h), lambda r: (r, 0)),
        ),
        compiler_params=pltpu.CompilerParams(
            dimension_semantics=("parallel",),
            vmem_limit_bytes=_VMEM_LIMIT),
    )(x_p, w1)

    # ---- conv1: H1 = relu(A @ XW1 + b1); fused HW2 = H1 @ W2 ---------------
    ce1 = pl.CostEstimate(
        flops=2 * nnz * tm * tk * h + 2 * n_pad * h * h,
        transcendentals=0,
        bytes_accessed=nnz * tm * tk * 2 + 4 * n_pad * h * 2)
    hw2 = pl.pallas_call(
        _conv1_kernel,
        out_shape=jax.ShapeDtypeStruct((n_pad, h), jnp.bfloat16),
        grid_spec=pltpu.PrefetchScalarGridSpec(
            num_scalar_prefetch=2,
            grid=(ni, nk),
            in_specs=[
                pl.BlockSpec((tm, tk), lambda i, k, bidx, bcnt: (i, bidx[i, k])),
                pl.BlockSpec((tk, h), lambda i, k, bidx, bcnt: (bidx[i, k], 0)),
                pl.BlockSpec((1, h), lambda i, k, bidx, bcnt: (0, 0)),
                pl.BlockSpec((h, h), lambda i, k, bidx, bcnt: (0, 0)),
            ],
            out_specs=pl.BlockSpec((tm, h), lambda i, k, bidx, bcnt: (i, 0)),
            scratch_shapes=[pltpu.VMEM((tm, h), jnp.float32)],
        ),
        compiler_params=pltpu.CompilerParams(
            dimension_semantics=("parallel", "arbitrary"),
            vmem_limit_bytes=_VMEM_LIMIT),
        cost_estimate=ce1,
    )(blk_idx, blk_cnt, a_p, xw1, b1, w2)

    # ---- conv2 + fused global_mean_pool ------------------------------------
    ce2 = pl.CostEstimate(
        flops=2 * nnz * tm * tk * h + 2 * n_pad * g * h,
        transcendentals=0,
        bytes_accessed=nnz * tm * tk * 2 + 2 * n_pad * h * 2 + g * n_pad * 4)
    pooled = pl.pallas_call(
        _conv2_pool_kernel,
        out_shape=jax.ShapeDtypeStruct((g, h), jnp.float32),
        grid_spec=pltpu.PrefetchScalarGridSpec(
            num_scalar_prefetch=2,
            grid=(ni, nk),
            in_specs=[
                pl.BlockSpec((tm, tk), lambda i, k, bidx, bcnt: (i, bidx[i, k])),
                pl.BlockSpec((tk, h), lambda i, k, bidx, bcnt: (bidx[i, k], 0)),
                pl.BlockSpec((1, h), lambda i, k, bidx, bcnt: (0, 0)),
                pl.BlockSpec((g, tm), lambda i, k, bidx, bcnt: (0, i)),
            ],
            out_specs=pl.BlockSpec((g, h), lambda i, k, bidx, bcnt: (0, 0)),
            scratch_shapes=[pltpu.VMEM((tm, h), jnp.float32),
                            pltpu.VMEM((g, h), jnp.float32)],
        ),
        compiler_params=pltpu.CompilerParams(
            dimension_semantics=("arbitrary", "arbitrary"),
            vmem_limit_bytes=_VMEM_LIMIT),
        cost_estimate=ce2,
    )(blk_idx, blk_cnt, a_p, hw2, b2, p_p)

    # ---- head: fc1 -> relu -> fc2 -> log_softmax on [G, 64] ----------------
    vmem = pl.BlockSpec(memory_space=pltpu.MemorySpace.VMEM)
    out = pl.pallas_call(
        _head_kernel,
        out_shape=jax.ShapeDtypeStruct((g, c), jnp.float32),
        in_specs=[vmem] * 5,
        out_specs=vmem,
        compiler_params=pltpu.CompilerParams(vmem_limit_bytes=_VMEM_LIMIT),
    )(pooled, params["wf1"], params["bf1"], params["wf2"], params["bf2"])
    return out


# ---------------- plain-JAX glue: graph preprocessing + params --------------
# TODO(synk): scatter construction of A_hat / mean-pool from (edge_index, batch)
# stays as plain-JAX preprocessing; the kernels consume the dense operators.

def build_norm_adj(edge_index, num_nodes):
    """Dense D^{-1/2} (A + I) D^{-1/2} from edge_index [2, E] (GCNConv gcn_norm)."""
    src, dst = edge_index[0], edge_index[1]
    a = jnp.zeros((num_nodes, num_nodes), jnp.float32)
    a = a.at[dst, src].set(1.0)
    a = a + jnp.eye(num_nodes, dtype=jnp.float32)
    deg = jnp.sum(a, axis=1)
    dinv = jnp.where(deg > 0, 1.0 / jnp.sqrt(deg), 0.0)
    return dinv[:, None] * a * dinv[None, :]


def build_mean_pool(batch, num_graphs):
    """[G, N] operator so that P @ X == global_mean_pool(X, batch)."""
    onehot = (batch[None, :] == jnp.arange(num_graphs)[:, None]).astype(jnp.float32)
    counts = jnp.sum(onehot, axis=1, keepdims=True)
    return onehot / jnp.maximum(counts, 1.0)


def init_params(key, num_features, num_classes):
    k1, k2, k3, k4 = jax.random.split(key, 4)

    def glorot(k, shape):
        fan_in, fan_out = shape
        lim = jnp.sqrt(6.0 / (fan_in + fan_out))
        return jax.random.uniform(k, shape, jnp.float32, -lim, lim)

    return {
        "w1": glorot(k1, (num_features, HIDDEN)), "b1": jnp.zeros((1, HIDDEN), jnp.float32),
        "w2": glorot(k2, (HIDDEN, HIDDEN)),       "b2": jnp.zeros((1, HIDDEN), jnp.float32),
        "wf1": glorot(k3, (HIDDEN, FC_HIDDEN)),   "bf1": jnp.zeros((1, FC_HIDDEN), jnp.float32),
        "wf2": glorot(k4, (FC_HIDDEN, num_classes)),
        "bf2": jnp.zeros((1, num_classes), jnp.float32),
    }


def reference_forward_mixed(params, a_hat, x, pool):
    """Same mixed bf16/f32 precision policy as the kernels."""
    a = a_hat.astype(jnp.bfloat16)
    xb = x.astype(jnp.bfloat16)
    xw1 = jnp.dot(xb, params["w1"].astype(jnp.bfloat16),
                  preferred_element_type=jnp.float32).astype(jnp.bfloat16)
    h1 = jnp.maximum(jnp.dot(a, xw1, preferred_element_type=jnp.float32)
                     + params["b1"], 0.0)
    hw2 = jnp.dot(h1.astype(jnp.bfloat16), params["w2"].astype(jnp.bfloat16),
                  preferred_element_type=jnp.float32).astype(jnp.bfloat16)
    h2 = jnp.maximum(jnp.dot(a, hw2, preferred_element_type=jnp.float32)
                     + params["b2"], 0.0)
    pooled = jnp.dot(pool, h2, preferred_element_type=jnp.float32)
    z = jnp.maximum(pooled @ params["wf1"] + params["bf1"], 0.0)
    z = z @ params["wf2"] + params["bf2"]
    return jax.nn.log_softmax(z, axis=1)


def reference_forward_f32(params, a_hat, x, pool):
    h = jnp.maximum(a_hat @ (x @ params["w1"]) + params["b1"], 0.0)
    h = jnp.maximum(a_hat @ (h @ params["w2"]) + params["b2"], 0.0)
    p = pool @ h
    z = jnp.maximum(p @ params["wf1"] + params["bf1"], 0.0)
    z = z @ params["wf2"] + params["bf2"]
    return jax.nn.log_softmax(z, axis=1)


if __name__ == "__main__":
    num_features, num_classes = 16, 4
    n_nodes, n_graphs = 16, 2

    key = jax.random.PRNGKey(0)
    kx, kp = jax.random.split(key)

    x = jax.random.normal(kx, (n_nodes, num_features), jnp.float32)

    # Two ring graphs of 8 nodes each (undirected: both directions listed).
    src_list, dst_list = [], []
    for gidx in range(n_graphs):
        off = gidx * 8
        for i in range(8):
            a_, b_ = off + i, off + (i + 1) % 8
            src_list += [a_, b_]
            dst_list += [b_, a_]
    edge_index = jnp.array([src_list, dst_list], dtype=jnp.int32)  # [2, E]
    batch = jnp.array([0] * 8 + [1] * 8, dtype=jnp.int32)          # [N]

    a_hat = build_norm_adj(edge_index, n_nodes)
    pool = build_mean_pool(batch, n_graphs)
    params = init_params(kp, num_features, num_classes)

    out = gcn_forward(params, a_hat, x, pool)
    out = jax.block_until_ready(out)

    ref_mixed = reference_forward_mixed(params, a_hat, x, pool)
    ref_f32 = reference_forward_f32(params, a_hat, x, pool)

    assert out.shape == (n_graphs, num_classes)
    assert bool(jnp.all(jnp.isfinite(out)))
    assert jnp.allclose(out, ref_mixed, atol=1e-3, rtol=1e-3)
    assert jnp.allclose(out, ref_f32, atol=1e-1, rtol=1e-1)

    print("KERNEL_OK")
</pallas_src>

<mosaic_0001>
module attributes {stable_mosaic.version = 11 : i64} {
  func.func @_linear_kernel(%arg0: i32, %arg1: memref<128x16xbf16, #tpu.memory_space<vmem>>, %arg2: memref<16x64xbf16, #tpu.memory_space<vmem>>, %arg3: memref<128x64xbf16, #tpu.memory_space<vmem>>) attributes {dimension_semantics = [#tpu.dimension_semantics<parallel>], iteration_bounds = array<i64: 2>, scalar_prefetch = 0 : i64, scratch_operands = 0 : i64, tpu.core_type = #tpu.core_type<tc>, window_params = [{transform_indices = @transform_0, window_bounds = array<i64: 128, 16>}, {pipeline_mode = #tpu.pipeline_mode<synchronous>, transform_indices = @transform_1, window_bounds = array<i64: 16, 64>}, {transform_indices = @transform_2, window_bounds = array<i64: 128, 64>}]} {
    %c0 = arith.constant 0 : index
    %c0_0 = arith.constant 0 : index
    %0 = vector.load %arg1[%c0, %c0_0] : memref<128x16xbf16, #tpu.memory_space<vmem>>, vector<128x16xbf16>
    %c0_1 = arith.constant 0 : index
    %c0_2 = arith.constant 0 : index
    %1 = vector.load %arg2[%c0_1, %c0_2] : memref<16x64xbf16, #tpu.memory_space<vmem>>, vector<16x64xbf16>
    %cst = arith.constant dense<0.000000e+00> : vector<128x64xf32>
    %2 = tpu.matmul %0, %1, %cst {dimension_numbers = #tpu.dot_dimension_numbers<[1], [0], [0], [1], [0, 0, 1, 1], [], []>} : vector<128x16xbf16>, vector<16x64xbf16>, vector<128x64xf32> -> vector<128x64xf32>
    %3 = arith.truncf %2 : vector<128x64xf32> to vector<128x64xbf16>
    %c0_3 = arith.constant 0 : index
    %c0_4 = arith.constant 0 : index
    %4 = vector.load %arg3[%c0_3, %c0_4] : memref<128x64xbf16, #tpu.memory_space<vmem>>, vector<128x64xbf16>
    tpu.vector_store %arg3[%c0_3, %c0_4], %3 {strides = array<i32>} : memref<128x64xbf16, #tpu.memory_space<vmem>>, vector<128x64xbf16>,
    return
  }
  func.func @transform_0(%arg0: i32) -> (i32, i32) {
    %c0_i32 = arith.constant 0 : i32
    %c0_i32_0 = arith.constant 0 : i32
    return %arg0, %c0_i32 : i32, i32
  }
  func.func @transform_1(%arg0: i32) -> (i32, i32) {
    %c0_i32 = arith.constant 0 : i32
    %c0_i32_0 = arith.constant 0 : i32
    %c0_i32_1 = arith.constant 0 : i32
    return %c0_i32, %c0_i32_0 : i32, i32
  }
  func.func @transform_2(%arg0: i32) -> (i32, i32) {
    %c0_i32 = arith.constant 0 : i32
    %c0_i32_0 = arith.constant 0 : i32
    return %arg0, %c0_i32 : i32, i32
  }
}

</mosaic_0001>

<llo_original>
// kernel: tpu_custom_call.1
$region0: #{tpu_custom_call.1}
  #allocation0 [shape = 'u32[]', space=smem, size = 0x4, offset = 0x4, fixed_abs, tag = 'smem constant byte address 0x4 - core index']
  #allocation1 [shape = 'u32[144,128]{1,0:T(1,128)}', space=vmem, size = 0x12000, scoped, tag = 'internal scratch']
  %s0 = inlined_call_operand.vmem [shape: bf16[256,16], index: 0, kind: input, shape index: {}]
  %s1 = inlined_call_operand.vmem [shape: bf16[16,64], index: 1, kind: input, shape index: {}]
  %s2 = inlined_call_operand.vmem [shape: bf16[256,64], index: 2, kind: output, shape index: {}]
  %s3 = sld [smem:[#allocation0]]
  $region41: #{tpu_custom_call.1} parent=0
    _
  %s5 = ssub.s32 1, %s3
  %s6 = scalar_select 0, %s5, %s3
  loop: start=0, step=1, limit=4
  $region2: #{tpu_custom_call.1} parent=0 // loop_pre_header
    _
  $region3: #{tpu_custom_call.1} parent=0 // loop_header
    %s8 = sphi 0, %s12
    %p9 = scmp.ge.s32.totalorder %s8, 4
    %s18 = sphi 0, %s20
    %s21 = sphi 0, %s18
    %s22 = sphi 0, %s21
    %s38 = sphi 0, %s22
    %s42 = sphi 0, %s42
    %s44 = sphi 0, %s42
    %s45 = sphi 0, %s44
    %s59 = sphi 0, %s45
    %s65 = sphi 0, %s67
    %s68 = sphi 0, %s65
    %s69 = sphi 0, %s68
    %s85 = sphi 0, %s69
  $region4: #{tpu_custom_call.1} parent=0 // loop_header_branch
    %11 = sbr.rel (%p9) target = $region8
  $region5: #{tpu_custom_call.1} parent=0 // loop_body
    %s13 = ssub.s32 %s8, 1
    %s14 = ssub.s32 %s8, 2
    %s15 = sadd.s32 %s8, 1
    %s16 = ssub.s32 %s8, %s15
    %p17 = scmp.eq.s32.totalorder %s16, 0
    %s19 = sadd.s32 %s18, 1
    %s20 = scalar_select %p17, %s18, %s19
    %p23 = pneg %p17
    %p24 = scmp.eq.s32.totalorder %s8, 1
    %p25 = por %p23, %p24
    %p26 = scmp.ne.s32.totalorder %s18, %s21
    %p27 = scmp.eq.s32.totalorder %s8, 0
    %p28 = por %p26, %p27
    %p29 = scmp.ne.s32.totalorder %s18, %s21
    %p30 = scmp.eq.s32.totalorder %s13, 1
    %p31 = por %p29, %p30
    %p32 = scmp.ne.s32.totalorder %s21, %s22
    %p33 = scmp.eq.s32.totalorder %s13, 0
    %p34 = por %p32, %p33
    %p35 = scmp.ne.s32.totalorder %s21, %s22
    %p36 = scmp.eq.s32.totalorder %s14, 1
    %p37 = por %p35, %p36
    %p39 = scmp.ne.s32.totalorder %s22, %s38
    %p40 = scmp.eq.s32.totalorder %s14, 0
    %p41 = por %p39, %p40
    %s43 = sadd.s32 %s42, 1
    %p46 = scmp.eq.s32.totalorder %s8, 1
    %p47 = scmp.ne.s32.totalorder %s42, %s44
    %p48 = scmp.eq.s32.totalorder %s8, 0
    %p49 = por %p47, %p48
    %p50 = scmp.ne.s32.totalorder %s42, %s44
    %p51 = scmp.eq.s32.totalorder %s13, 1
    %p52 = por %p50, %p51
    %p53 = scmp.ne.s32.totalorder %s44, %s45
    %p54 = scmp.eq.s32.totalorder %s13, 0
    %p55 = por %p53, %p54
    %p56 = scmp.ne.s32.totalorder %s44, %s45
    %p57 = scmp.eq.s32.totalorder %s14, 1
    %p58 = por %p56, %p57
    %p60 = scmp.ne.s32.totalorder %s45, %s59
    %p61 = scmp.eq.s32.totalorder %s14, 0
    %p62 = por %p60, %p61
    %s63 = ssub.s32 %s8, %s15
    %p64 = scmp.eq.s32.totalorder %s63, 0
    %s66 = sadd.s32 %s65, 1
    %s67 = scalar_select %p64, %s65, %s66
    %p70 = pneg %p64
    %p71 = scmp.eq.s32.totalorder %s8, 1
    %p72 = por %p70, %p71
    %p73 = scmp.ne.s32.totalorder %s65, %s68
    %p74 = scmp.eq.s32.totalorder %s8, 0
    %p75 = por %p73, %p74
    %p76 = scmp.ne.s32.totalorder %s65, %s68
    %p77 = scmp.eq.s32.totalorder %s13, 1
    %p78 = por %p76, %p77
    %p79 = scmp.ne.s32.totalorder %s68, %s69
    %p80 = scmp.eq.s32.totalorder %s13, 0
    %p81 = por %p79, %p80
    %p82 = scmp.ne.s32.totalorder %s68, %s69
    %p83 = scmp.eq.s32.totalorder %s14, 1
    %p84 = por %p82, %p83
    %p86 = scmp.ne.s32.totalorder %s69, %s85
    %p87 = scmp.eq.s32.totalorder %s14, 0
    %p88 = por %p86, %p87
    %p89 = scmp.le.s32.totalorder 1, %s8
    %p90 = scmp.lt.s32.totalorder %s8, 3
    %p91 = pnand %p89, %p90
    %p92 = pneg %p91
    // Predicated region
    $region9: #{tpu_custom_call.1} parent=5 // pred_check
      _
    $region10: #{tpu_custom_call.1} parent=5 // pred_check_branch
      %94 = sbr.rel (%p91) target = $region12
    $region11: #{tpu_custom_call.1} parent=5 // pred_region
      %s95 = ssub.s32 %s8, 1
      // Predicated region
      $region13: #{tpu_custom_call.1} parent=11 // pred_check
        %p96 = pneg %p55
      $region14: #{tpu_custom_call.1} parent=11 // pred_check_branch
        %98 = sbr.rel (%p96) target = $region16
      $region15: #{tpu_custom_call.1} parent=11 // pred_region
        _
      $region16: #{tpu_custom_call.1} parent=11 // pred_fallthru
        _
    $region12: #{tpu_custom_call.1} parent=5 // pred_fallthru
      _
    %p99 = scmp.lt.s32.totalorder %s8, 2
    // Predicated region
    $region17: #{tpu_custom_call.1} parent=5 // pred_check
      %p100 = pneg %p99
    $region18: #{tpu_custom_call.1} parent=5 // pred_check_branch
      %102 = sbr.rel (%p100) target = $region20
    $region19: #{tpu_custom_call.1} parent=5 // pred_region
      // Predicated region
      $region21: #{tpu_custom_call.1} parent=19 // pred_check
        %p103 = pneg %p28
      $region22: #{tpu_custom_call.1} parent=19 // pred_check_branch
        %105 = sbr.rel (%p103) target = $region24
      $region23: #{tpu_custom_call.1} parent=19 // pred_region
        %s106 = smul.u32 16, %s8
        %p107 = scmp.lt.s32.totalorder %s106, 31
        %s108 = scalar_select %p107, %s106, 31
        %s109 = smul.addr %s108, 4
        %s110 = scalar_lea.vmem %s0, %s109
        %s111 = smul.u32 16, %s8
      $region24: #{tpu_custom_call.1} parent=19 // pred_fallthru
        _
    $region20: #{tpu_custom_call.1} parent=5 // pred_fallthru
      _
    %p112 = scmp.le.s32.totalorder 1, %s8
    %p113 = scmp.lt.s32.totalorder %s8, 3
    %p114 = pnand %p112, %p113
    %p115 = pneg %p114
    // Predicated region
    $region25: #{tpu_custom_call.1} parent=5 // pred_check
      _
    $region26: #{tpu_custom_call.1} parent=5 // pred_check_branch
      %117 = sbr.rel (%p114) target = $region28
    $region27: #{tpu_custom_call.1} parent=5 // pred_region
      %s118 = ssub.s32 %s8, 1
      %s119 = smul.u32 16, %s13
      %p120 = scmp.lt.s32.totalorder %s119, 31
      %s121 = scalar_select %p120, %s119, 31
      %s122 = smul.addr %s121, 4
      %s123 = scalar_lea.vmem %s0, %s122
      %p124 = pneg %p34
      %p125 = pneg %p31
      %p126 = pneg %p55
      %p127 = pneg %p52
      %p128 = pneg %p81
      %p129 = pneg %p78
      %s130 = smul.u32 16, %s13
      %p131 = scmp.lt.s32.totalorder %s130, 31
      %s132 = scalar_select %p131, %s130, 31
      %s133 = smul.addr %s132, 4
      %s134 = scalar_lea.vmem %s2, %s133
      %s135 = smul.u32 16, %s13
      %p136 = scmp.lt.s32.totalorder %s135, 31
      %s137 = scalar_select %p136, %s135, 31
      %s138 = smul.addr %s137, 4
      %s139 = scalar_lea.vmem %s0, %s138
      %s140 = smul.u32 16, %s13
      %s141 = smul.u32 16, %s13
      %p142 = scmp.lt.s32.totalorder %s141, 31
      %s143 = scalar_select %p142, %s141, 31
      %s144 = smul.addr %s143, 4
      %s145 = scalar_lea.vmem %s2, %s144
      %s146 = smul.u32 16, %s13
      %v148 = vld [vmem:[%s139] sm:$0xf]
      %v149 = vld [vmem:[%s139 + $0x4] sm:$0xf]
      %v150 = vld [vmem:[%s139 + $0x8] sm:$0xf]
      %v151 = vld [vmem:[%s139 + $0xc] sm:$0xf]
      %v152 = vld [vmem:[%s139 + $0x10] sm:$0xf]
      %v153 = vld [vmem:[%s139 + $0x14] sm:$0xf]
      %v154 = vld [vmem:[%s139 + $0x18] sm:$0xf]
      %v155 = vld [vmem:[%s139 + $0x1c] sm:$0xf]
      %v156 = vld [vmem:[%s139 + $0x20] sm:$0xf]
      %v157 = vld [vmem:[%s139 + $0x24] sm:$0xf]
      %v158 = vld [vmem:[%s139 + $0x28] sm:$0xf]
      %v159 = vld [vmem:[%s139 + $0x2c] sm:$0xf]
      %v160 = vld [vmem:[%s139 + $0x30] sm:$0xf]
      %v161 = vld [vmem:[%s139 + $0x34] sm:$0xf]
      %v162 = vld [vmem:[%s139 + $0x38] sm:$0xf]
      %v163 = vld [vmem:[%s139 + $0x3c] sm:$0xf]
      %v164 = vld [vmem:[%s1] sm:$0xf]
      %v165 = vld [vmem:[%s1 + $0x4] sm:$0xf]
      %v182 = vunpack.c.l.b16 %v148
      %v183 = vunpack.c.l.b16 %v149
      %v184 = vunpack.c.l.b16 %v150
      %v185 = vunpack.c.l.b16 %v151
      %v186 = vunpack.c.l.b16 %v152
      %v187 = vunpack.c.l.b16 %v153
      %v188 = vunpack.c.l.b16 %v154
      %v189 = vunpack.c.l.b16 %v155
      %v190 = vunpack.c.l.b16 %v156
      %v191 = vunpack.c.l.b16 %v157
      %v192 = vunpack.c.l.b16 %v158
      %v193 = vunpack.c.l.b16 %v159
      %v194 = vunpack.c.l.b16 %v160
      %v195 = vunpack.c.l.b16 %v161
      %v196 = vunpack.c.l.b16 %v162
      %v197 = vunpack.c.l.b16 %v163
      %v198 = vpack.c.b16 %v183, %v182
      %v199 = vpack.c.b16 %v185, %v184
      %v200 = vpack.c.b16 %v187, %v186
      %v201 = vpack.c.b16 %v189, %v188
      %v202 = vpack.c.b16 %v191, %v190
      %v203 = vpack.c.b16 %v193, %v192
      %v204 = vpack.c.b16 %v195, %v194
      %v205 = vpack.c.b16 %v197, %v196
      %v208 = vunpack.c.l.b16 %v164
      %v209 = vunpack.c.l.b16 %v165
      %v210 = vpack.c.b16 %v209, %v208
      %vm212 = vcmask 130048
      %v214 = vsel %vm212, %v198, 0
      %v217 = vsel %vm212, %v199, 0
      %v220 = vsel %vm212, %v200, 0
      %v223 = vsel %vm212, %v201, 0
      %v226 = vsel %vm212, %v202, 0
      %v229 = vsel %vm212, %v203, 0
      %v232 = vsel %vm212, %v204, 0
      %v235 = vsel %vm212, %v205, 0
      %237 = vmatprep.subr.bf16.mxu0 0
      %238 = vmatpush1.bf16.msra.mxu0 0
      %239 = vmatprep.subr.bf16.mxu0 0
      %240 = vmatpush1.bf16.msra.mxu0 0
      %241 = vmatprep.subr.bf16.mxu0 0
      %242 = vmatpush1.bf16.msra.mxu0 0
      %243 = vmatprep.subr.bf16.mxu0 0
      %244 = vmatpush1.bf16.msra.mxu0 0
      %245 = vmatprep.subr.bf16.mxu0 0
      %246 = vmatpush1.bf16.msra.mxu0 0
      %247 = vmatprep.subr.bf16.mxu0 0
      %248 = vmatpush1.bf16.msra.mxu0 0
      %249 = vmatprep.subr.bf16.mxu0 0
      %250 = vmatpush1.bf16.msra.mxu0 0
      %251 = vmatprep.subr.bf16.mxu0 0
      %252 = vmatpush1.bf16.msra.mxu0 %v210
      %253 = vmatprep.subr.bf16.mxu0 0
      %254 = vmatpush2.bf16.msra.mxu0 0
      %255 = vmatprep.subr.bf16.mxu0 0
      %256 = vmatpush2.bf16.msra.mxu0 0
      %257 = vmatprep.subr.bf16.mxu0 0
      %258 = vmatpush2.bf16.msra.mxu0 0
      %259 = vmatprep.subr.bf16.mxu0 0
      %260 = vmatpush2.bf16.msra.mxu0 0
      %261 = vmatprep.subr.bf16.mxu0 0
      %262 = vmatpush2.bf16.msra.mxu0 0
      %263 = vmatprep.subr.bf16.mxu0 0
      %264 = vmatpush2.bf16.msra.mxu0 0
      %265 = vmatprep.subr.bf16.mxu0 0
      %266 = vmatpush2.bf16.msra.mxu0 0
      %267 = vmatprep.subr.bf16.mxu0 0
      %268 = vmatpush2.bf16.msra.mxu0 0
      %269 = vmatprep.mubr.bf16.mxu0 0
      %270 = vmatmul.mubr.bf16.gmra.mxu0 %v214
      %v271 = vpop.f32.mrf.mxu0
      %v272 = vadd.f32 0.0, %v271
      %v273 = vpop.f32.mrf.mxu0
      %v274 = vpop.f32.mrf.mxu0
      %v275 = vadd.f32 0.0, %v274
      %v276 = vpop.f32.mrf.mxu0
      %277 = vmatprep.mubr.bf16.mxu0 0
      %278 = vmatmul.mubr.bf16.gmra.mxu0 %v217
      %v279 = vpop.f32.mrf.mxu0
      %v280 = vadd.f32 0.0, %v279
      %v281 = vpop.f32.mrf.mxu0
      %v282 = vpop.f32.mrf.mxu0
      %v283 = vadd.f32 0.0, %v282
      %v284 = vpop.f32.mrf.mxu0
      %285 = vmatprep.mubr.bf16.mxu0 0
      %286 = vmatmul.mubr.bf16.gmra.mxu0 %v220
      %v287 = vpop.f32.mrf.mxu0
      %v288 = vadd.f32 0.0, %v287
      %v289 = vpop.f32.mrf.mxu0
      %v290 = vpop.f32.mrf.mxu0
      %v291 = vadd.f32 0.0, %v290
      %v292 = vpop.f32.mrf.mxu0
      %293 = vmatprep.mubr.bf16.mxu0 0
      %294 = vmatmul.mubr.bf16.gmra.mxu0 %v223
      %v295 = vpop.f32.mrf.mxu0
      %v296 = vadd.f32 0.0, %v295
      %v297 = vpop.f32.mrf.mxu0
      %v298 = vpop.f32.mrf.mxu0
      %v299 = vadd.f32 0.0, %v298
      %v300 = vpop.f32.mrf.mxu0
      %301 = vmatprep.mubr.bf16.mxu0 0
      %302 = vmatmul.mubr.bf16.gmra.mxu0 %v226
      %v303 = vpop.f32.mrf.mxu0
      %v304 = vadd.f32 0.0, %v303
      %v305 = vpop.f32.mrf.mxu0
      %v306 = vpop.f32.mrf.mxu0
      %v307 = vadd.f32 0.0, %v306
      %v308 = vpop.f32.mrf.mxu0
      %309 = vmatprep.mubr.bf16.mxu0 0
      %310 = vmatmul.mubr.bf16.gmra.mxu0 %v229
      %v311 = vpop.f32.mrf.mxu0
      %v312 = vadd.f32 0.0, %v311
      %v313 = vpop.f32.mrf.mxu0
      %v314 = vpop.f32.mrf.mxu0
      %v315 = vadd.f32 0.0, %v314
      %v316 = vpop.f32.mrf.mxu0
      %317 = vmatprep.mubr.bf16.mxu0 0
      %318 = vmatmul.mubr.bf16.gmra.mxu0 %v232
      %v319 = vpop.f32.mrf.mxu0
      %v320 = vadd.f32 0.0, %v319
      %v321 = vpop.f32.mrf.mxu0
      %v322 = vpop.f32.mrf.mxu0
      %v323 = vadd.f32 0.0, %v322
      %v324 = vpop.f32.mrf.mxu0
      %325 = vmatprep.mubr.bf16.mxu0 0
      %326 = vmatmul.mubr.bf16.gmra.mxu0 %v235
      %v327 = vpop.f32.mrf.mxu0
      %v328 = vadd.f32 0.0, %v327
      %v329 = vpop.f32.mrf.mxu0
      %v330 = vpop.f32.mrf.mxu0
      %v331 = vadd.f32 0.0, %v330
      %v332 = vpop.f32.mrf.mxu0
      %333 = vdwg.mxu0
      %v334 = vpack.c.bf16 %v275, %v272
      %v335 = vpack.c.bf16 %v283, %v280
      %v336 = vpack.c.bf16 %v291, %v288
      %v337 = vpack.c.bf16 %v299, %v296
      %v338 = vpack.c.bf16 %v307, %v304
      %v339 = vpack.c.bf16 %v315, %v312
      %v340 = vpack.c.bf16 %v323, %v320
      %v341 = vpack.c.bf16 %v331, %v328
      %v350 = vunpack.c.l.b16 %v334
      %v351 = vunpack.c.h.b16 %v334
      %v352 = vunpack.c.l.b16 %v335
      %v353 = vunpack.c.h.b16 %v335
      %v354 = vunpack.c.l.b16 %v336
      %v355 = vunpack.c.h.b16 %v336
      %v356 = vunpack.c.l.b16 %v337
      %v357 = vunpack.c.h.b16 %v337
      %v358 = vunpack.c.l.b16 %v338
      %v359 = vunpack.c.h.b16 %v338
      %v360 = vunpack.c.l.b16 %v339
      %v361 = vunpack.c.h.b16 %v339
      %v362 = vunpack.c.l.b16 %v340
      %v363 = vunpack.c.h.b16 %v340
      %v364 = vunpack.c.l.b16 %v341
      %v365 = vunpack.c.h.b16 %v341
      %v366 = vpack.c.b16 %v350, %v350
      %v367 = vpack.c.b16 %v351, %v351
      %v368 = vpack.c.b16 %v352, %v352
      %v369 = vpack.c.b16 %v353, %v353
      %v370 = vpack.c.b16 %v354, %v354
      %v371 = vpack.c.b16 %v355, %v355
      %v372 = vpack.c.b16 %v356, %v356
      %v373 = vpack.c.b16 %v357, %v357
      %v374 = vpack.c.b16 %v358, %v358
      %v375 = vpack.c.b16 %v359, %v359
      %v376 = vpack.c.b16 %v360, %v360
      %v377 = vpack.c.b16 %v361, %v361
      %v378 = vpack.c.b16 %v362, %v362
      %v379 = vpack.c.b16 %v363, %v363
      %v380 = vpack.c.b16 %v364, %v364
      %v381 = vpack.c.b16 %v365, %v365
      %vm398 = vcmask 519168
      %399 = vst.msk [vmem:[%s145] sm:$0xf] %vm398, %v366
      %400 = vst.msk [vmem:[%s145 + $0x4] sm:$0xf] %vm398, %v367
      %401 = vst.msk [vmem:[%s145 + $0x8] sm:$0xf] %vm398, %v368
      %402 = vst.msk [vmem:[%s145 + $0xc] sm:$0xf] %vm398, %v369
      %403 = vst.msk [vmem:[%s145 + $0x10] sm:$0xf] %vm398, %v370
      %404 = vst.msk [vmem:[%s145 + $0x14] sm:$0xf] %vm398, %v371
      %405 = vst.msk [vmem:[%s145 + $0x18] sm:$0xf] %vm398, %v372
      %406 = vst.msk [vmem:[%s145 + $0x1c] sm:$0xf] %vm398, %v373
      %407 = vst.msk [vmem:[%s145 + $0x20] sm:$0xf] %vm398, %v374
      %408 = vst.msk [vmem:[%s145 + $0x24] sm:$0xf] %vm398, %v375
      %409 = vst.msk [vmem:[%s145 + $0x28] sm:$0xf] %vm398, %v376
      %410 = vst.msk [vmem:[%s145 + $0x2c] sm:$0xf] %vm398, %v377
      %411 = vst.msk [vmem:[%s145 + $0x30] sm:$0xf] %vm398, %v378
      %412 = vst.msk [vmem:[%s145 + $0x34] sm:$0xf] %vm398, %v379
      %413 = vst.msk [vmem:[%s145 + $0x38] sm:$0xf] %vm398, %v380
      %414 = vst.msk [vmem:[%s145 + $0x3c] sm:$0xf] %vm398, %v381
      %s415 = smul.u32 16, %s13
      %p416 = scmp.lt.s32.totalorder %s415, 31
      %s417 = scalar_select %p416, %s415, 31
      %s418 = smul.addr %s417, 4
      %s419 = scalar_lea.vmem %s2, %s418
      // Predicated region
      $region29: #{tpu_custom_call.1} parent=27 // pred_check
        %p420 = pneg %p78
      $region30: #{tpu_custom_call.1} parent=27 // pred_check_branch
        %422 = sbr.rel (%p420) target = $region32
      $region31: #{tpu_custom_call.1} parent=27 // pred_region
        %s423 = smul.u32 16, %s13
      $region32: #{tpu_custom_call.1} parent=27 // pred_fallthru
        _
    $region28: #{tpu_custom_call.1} parent=5 // pred_fallthru
      _
    %p424 = scmp.le.s32.totalorder 2, %s8
    // Predicated region
    $region33: #{tpu_custom_call.1} parent=5 // pred_check
      %p425 = pneg %p424
    $region34: #{tpu_custom_call.1} parent=5 // pred_check_branch
      %427 = sbr.rel (%p425) target = $region36
    $region35: #{tpu_custom_call.1} parent=5 // pred_region
      %s428 = ssub.s32 %s8, 2
      // Predicated region
      $region37: #{tpu_custom_call.1} parent=35 // pred_check
        %p429 = pneg %p84
      $region38: #{tpu_custom_call.1} parent=35 // pred_check_branch
        %431 = sbr.rel (%p429) target = $region40
      $region39: #{tpu_custom_call.1} parent=35 // pred_region
        %s432 = smul.u32 16, %s14
        %p433 = scmp.lt.s32.totalorder %s432, 31
        %s434 = scalar_select %p433, %s432, 31
        %s435 = smul.addr %s434, 4
        %s436 = scalar_lea.vmem %s2, %s435
      $region40: #{tpu_custom_call.1} parent=35 // pred_fallthru
        _
    $region36: #{tpu_custom_call.1} parent=5 // pred_fallthru
      _
  $region6: #{tpu_custom_call.1} parent=0 // loop_footer
    %s12 = sadd.s32 1, %s8
  $region7: #{tpu_custom_call.1} parent=0 // loop_footer_branch
    %7 = sbr.rel target = $region3
  $region8: #{tpu_custom_call.1} parent=0 // loop_exit
    _

</llo_original>
